<compile_context>
chip_gen: v6e
topology: v6e:2x2x1
jax: 0.10.0
libtpu: 0.0.40
codegen_flags: <defaults>
</compile_context>

<pallas_src>
import jax
import jax.numpy as jnp
from jax.experimental import pallas as pl
from jax.experimental.pallas import tpu as pltpu


def _graphsage_kernel(h_ref,                      # VMEM (Nsrc_p, Cp)   relu(src@W1+b1), per batch
                      x_ref,                      # VMEM (tile_n, Cp)   destination-node tile
                      e_ref,                      # VMEM (tile_n, K)    neighbor indices (int32)
                      w2t_ref, w2b_ref, b2_ref,   # (Cp, Coutp), (Cp, Coutp), (1, Coutp)
                      o_ref):                     # VMEM (tile_n, Coutp)
    h = h_ref[...]                                                     # (Nsrc_p, Cp)
    idx = e_ref[...]                                                   # (tile_n, K)
    tn, kk = idx.shape
    nsrc = h.shape[0]

    # Neighbor-major, fully vectorized gather + running max over K.
    # one_hot @ H selects row idx[i, j] of H exactly (0/1 weights, exact f32 arithmetic).
    pos = jax.lax.broadcasted_iota(jnp.int32, (tn, nsrc), 1)
    acc = None
    for j in range(kk):                                                # K small & static: unrolled
        one_hot = (idx[:, j:j + 1] == pos).astype(h.dtype)             # (tile_n, Nsrc_p)
        g = jnp.dot(one_hot, h, preferred_element_type=jnp.float32)    # (tile_n, Cp)  MXU gather
        acc = g if acc is None else jnp.maximum(acc, g)

    # nn2 without the concat: out = relu(x @ W2_top + maxK(nn1(x_j)) @ W2_bot + b2).
    out = jnp.dot(x_ref[...], w2t_ref[...], preferred_element_type=jnp.float32)
    out = out + jnp.dot(acc, w2b_ref[...], preferred_element_type=jnp.float32)
    o_ref[...] = jnp.maximum(out + b2_ref[...], 0.0)                   # lane-dense store


def _round_up(n, m):
    return ((n + m - 1) // m) * m


def _pad_to(a, axis, target):
    pad = target - a.shape[axis]
    if pad <= 0:
        return a
    widths = [(0, 0)] * a.ndim
    widths[axis] = (0, pad)
    return jnp.pad(a, widths)


def grouped_weight_to_blockdiag(w, groups):
    """torch-style grouped conv weight (out_c, in_c//groups, 1, 1) -> dense (in_c, out_c)."""
    out_c, in_pg = w.shape[0], w.shape[1]
    out_pg = out_c // groups
    full = jnp.zeros((in_pg * groups, out_c), w.dtype)
    for g in range(groups):
        blk = w[g * out_pg:(g + 1) * out_pg, :, 0, 0]          # (out_pg, in_pg)
        full = full.at[g * in_pg:(g + 1) * in_pg,
                       g * out_pg:(g + 1) * out_pg].set(blk.T)
    return full


def init_params(key, in_channels, out_channels, groups=4):
    k1, k2, k3, k4 = jax.random.split(key, 4)
    # BasicConv([C, C])       : Conv2d(C, C, 1, groups=4, bias=True) + ReLU
    w1 = 0.1 * jax.random.normal(k1, (in_channels, in_channels // groups, 1, 1), jnp.float32)
    b1 = 0.1 * jax.random.normal(k2, (in_channels,), jnp.float32)
    # BasicConv([2C, Cout])   : Conv2d(2C, Cout, 1, groups=4, bias=True) + ReLU
    w2 = 0.1 * jax.random.normal(k3, (out_channels, 2 * in_channels // groups, 1, 1), jnp.float32)
    b2 = 0.1 * jax.random.normal(k4, (out_channels,), jnp.float32)
    return {
        "w1": grouped_weight_to_blockdiag(w1, groups),   # (C, C)
        "b1": b1[None, :],                               # (1, C)
        "w2": grouped_weight_to_blockdiag(w2, groups),   # (2C, Cout)
        "b2": b2[None, :],                               # (1, Cout)
    }


def graphsage_forward(x, edge_index, params, y=None, tile_n=128, lane=128):
    """x: (B, C, N, 1) f32, edge_index: (2, B, N, K) i32, y: optional (B, C, Nsrc, 1)."""
    B, C, N, _ = x.shape
    K = int(edge_index.shape[-1])
    Cout = int(params["b2"].shape[-1])

    src = x if y is None else y
    Nsrc = int(src.shape[2])

    # Lane-dense channel padding and sublane-aligned node padding (all exact).
    Cp = _round_up(C, lane)
    Coutp = _round_up(Cout, lane)
    tile_n = _round_up(max(8, min(tile_n, _round_up(N, 8))), 8)
    Np = _round_up(N, tile_n)
    Nsp = _round_up(Nsrc, 8)
    nt = Np // tile_n

    # channels-last
    x_nc = jnp.transpose(x[..., 0], (0, 2, 1))            # (B, N, C)
    src_nc = jnp.transpose(src[..., 0], (0, 2, 1))        # (B, Nsrc, C)

    x_p = _pad_to(_pad_to(x_nc, 2, Cp), 1, Np)            # (B, Np, Cp)
    src_p = _pad_to(_pad_to(src_nc, 2, Cp), 1, Nsp)       # (B, Nsp, Cp)
    edge_p = _pad_to(edge_index[0].astype(jnp.int32), 1, Np)   # (B, Np, K); pads = 0 (valid row)

    w1_p = _pad_to(_pad_to(params["w1"], 0, Cp), 1, Cp)   # (Cp, Cp)
    b1_p = _pad_to(params["b1"], 1, Cp)                   # (1, Cp)
    w2 = params["w2"]                                      # (2C, Cout)
    w2t = _pad_to(_pad_to(w2[:C], 0, Cp), 1, Coutp)       # (Cp, Coutp)  multiplies x
    w2b = _pad_to(_pad_to(w2[C:], 0, Cp), 1, Coutp)       # (Cp, Coutp)  multiplies maxK(nn1(x_j))
    b2_p = _pad_to(params["b2"], 1, Coutp)                 # (1, Coutp)

    # nn1 hoisted out of the kernel: one big XLA matmul at full MXU efficiency.
    # Valid because nn1 is pointwise, so conv1x1(gather(x)) == gather(conv1x1(x)).
    h = jnp.maximum(jnp.einsum("bnc,cd->bnd", src_p, w1_p) + b1_p, 0.0)   # (B, Nsp, Cp)

    flops = 2 * B * Np * K * Nsp * Cp + 4 * B * Np * Cp * Coutp
    bytes_accessed = 4 * (B * Nsp * Cp + B * Np * Cp + B * Np * K + B * Np * Coutp
                          + 2 * Cp * Coutp + Coutp)

    # VMEM budget: double-buffered blocks + in-kernel temporaries; cap at 48 MiB so the
    # compiler keeps headroom even on v7x (64 MiB physical).
    per_step = 4 * (Nsp * Cp + tile_n * Cp + tile_n * K + tile_n * Coutp
                    + 2 * Cp * Coutp + Coutp)
    temporaries = 4 * (tile_n * Nsp + 3 * tile_n * max(Cp, Coutp))
    vmem_limit = int(min(48 * 1024 * 1024,
                         max(8 * 1024 * 1024, 2 * per_step + 2 * temporaries)))
    try:  # re-derive the cap per chip generation instead of hard-coding it
        vmem_limit = int(min(vmem_limit,
                             (3 * pltpu.get_tpu_info().vmem_capacity_bytes) // 4))
    except Exception:
        pass

    out = pl.pallas_call(
        _graphsage_kernel,
        out_shape=jax.ShapeDtypeStruct((B, Np, Coutp), jnp.float32),
        grid=(B, nt),
        in_specs=[
            pl.BlockSpec((None, Nsp, Cp), lambda b, t: (b, 0, 0)),     # H (resident per batch)
            pl.BlockSpec((None, tile_n, Cp), lambda b, t: (b, t, 0)),  # destination node tile
            pl.BlockSpec((None, tile_n, K), lambda b, t: (b, t, 0)),   # neighbor indices
            pl.BlockSpec((Cp, Coutp), lambda b, t: (0, 0)),            # W2 top half
            pl.BlockSpec((Cp, Coutp), lambda b, t: (0, 0)),            # W2 bottom half
            pl.BlockSpec((1, Coutp), lambda b, t: (0, 0)),             # b2
        ],
        out_specs=pl.BlockSpec((None, tile_n, Coutp), lambda b, t: (b, t, 0)),
        compiler_params=pltpu.CompilerParams(
            dimension_semantics=("parallel", "parallel"),              # both axes independent now
            vmem_limit_bytes=vmem_limit),
        cost_estimate=pl.CostEstimate(flops=flops, transcendentals=0,
                                      bytes_accessed=bytes_accessed),
    )(h, x_p, edge_p, w2t, w2b, b2_p)

    out = out[:, :N, :Cout]                                # drop node / channel padding
    return jnp.transpose(out, (0, 2, 1))[..., None]        # back to PyTorch layout (B, Cout, N, 1)


def graphsage_ref(x, edge_index, params, y=None):
    """Pure-JAX reference mirroring the PyTorch forward, for verification."""
    src = x if y is None else y
    src3 = src[..., 0]                                                # (B, C, Nsrc)
    edge0 = edge_index[0]                                             # (B, N, K)
    x_j = jax.vmap(lambda s, i: s[:, i])(src3, edge0)                 # (B, C, N, K)
    h = jnp.einsum("bcnk,cd->bdnk", x_j, params["w1"]) + params["b1"][0][None, :, None, None]
    h = jnp.maximum(h, 0.0)
    xjm = jnp.max(h, axis=-1, keepdims=True)                          # (B, C, N, 1)
    cat = jnp.concatenate([x, xjm], axis=1)                           # (B, 2C, N, 1)
    out = jnp.einsum("bcnk,cd->bdnk", cat, params["w2"]) + params["b2"][0][None, :, None, None]
    return jnp.maximum(out, 0.0)


if __name__ == "__main__":
    key = jax.random.PRNGKey(0)
    kx, ke, kp = jax.random.split(key, 3)

    # Small shapes; N is deliberately NOT a multiple of the tile to exercise tail padding.
    B, C, N, K, Cout = 2, 8, 14, 8, 16
    x = jax.random.normal(kx, (B, C, N, 1), jnp.float32)
    edge_index = jax.random.randint(ke, (2, B, N, K), 0, N, jnp.int32)
    params = init_params(kp, C, Cout)

    out = graphsage_forward(x, edge_index, params, tile_n=8)          # 2 node tiles per batch
    out = jax.block_until_ready(out)

    ref = graphsage_ref(x, edge_index, params)
    assert out.shape == (B, Cout, N, 1), out.shape
    err = float(jnp.max(jnp.abs(out - ref)))
    assert jnp.allclose(out, ref, atol=1e-4, rtol=1e-4), err
    print("KERNEL_OK")
</pallas_src>

<mosaic_0001>
module attributes {stable_mosaic.version = 11 : i64} {
  func.func @_graphsage_kernel(%arg0: i32, %arg1: i32, %arg2: memref<1x16x128xf32, #tpu.memory_space<vmem>>, %arg3: memref<1x8x128xf32, #tpu.memory_space<vmem>>, %arg4: memref<1x8x8xi32, #tpu.memory_space<vmem>>, %arg5: memref<128x128xf32, #tpu.memory_space<vmem>>, %arg6: memref<128x128xf32, #tpu.memory_space<vmem>>, %arg7: memref<1x128xf32, #tpu.memory_space<vmem>>, %arg8: memref<1x8x128xf32, #tpu.memory_space<vmem>>) attributes {dimension_semantics = [#tpu.dimension_semantics<parallel>, #tpu.dimension_semantics<parallel>], iteration_bounds = array<i64: 2, 2>, scalar_prefetch = 0 : i64, scratch_operands = 0 : i64, tpu.core_type = #tpu.core_type<tc>, window_params = [{transform_indices = @transform_0, window_bounds = array<i64: 1, 16, 128>}, {transform_indices = @transform_1, window_bounds = array<i64: 1, 8, 128>}, {transform_indices = @transform_2, window_bounds = array<i64: 1, 8, 8>}, {pipeline_mode = #tpu.pipeline_mode<synchronous>, transform_indices = @transform_3, window_bounds = array<i64: 128, 128>}, {pipeline_mode = #tpu.pipeline_mode<synchronous>, transform_indices = @transform_4, window_bounds = array<i64: 128, 128>}, {pipeline_mode = #tpu.pipeline_mode<synchronous>, transform_indices = @transform_5, window_bounds = array<i64: 1, 128>}, {transform_indices = @transform_6, window_bounds = array<i64: 1, 8, 128>}]} {
    %c0 = arith.constant 0 : index
    %c0_0 = arith.constant 0 : index
    %c0_1 = arith.constant 0 : index
    %0 = vector.load %arg2[%c0, %c0_0, %c0_1] : memref<1x16x128xf32, #tpu.memory_space<vmem>>, vector<1x16x128xf32>
    %1 = vector.shape_cast %0 : vector<1x16x128xf32> to vector<16x128xf32>
    %c0_2 = arith.constant 0 : index
    %c0_3 = arith.constant 0 : index
    %c0_4 = arith.constant 0 : index
    %2 = vector.load %arg4[%c0_2, %c0_3, %c0_4] : memref<1x8x8xi32, #tpu.memory_space<vmem>>, vector<1x8x8xi32>
    %3 = vector.shape_cast %2 : vector<1x8x8xi32> to vector<8x8xi32>
    %4 = tpu.iota {dimensions = array<i32: 1>} : vector<8x16xi32>
    %5 = vector.extract_strided_slice %3 {offsets = [0, 0], sizes = [8, 1], strides = [1, 1]} : vector<8x8xi32> to vector<8x1xi32>
    %6 = vector.broadcast %5 : vector<8x1xi32> to vector<8x16xi32>
    %7 = arith.cmpi eq, %6, %4 : vector<8x16xi32>
    %8 = arith.extui %7 : vector<8x16xi1> to vector<8x16xi32>
    %9 = arith.sitofp %8 : vector<8x16xi32> to vector<8x16xf32>
    %cst = arith.constant dense<0.000000e+00> : vector<8x128xf32>
    %10 = tpu.matmul %9, %1, %cst {dimension_numbers = #tpu.dot_dimension_numbers<[1], [0], [0], [1], [0, 0, 1, 1], [], []>} : vector<8x16xf32>, vector<16x128xf32>, vector<8x128xf32> -> vector<8x128xf32>
    %11 = vector.extract_strided_slice %3 {offsets = [0, 1], sizes = [8, 1], strides = [1, 1]} : vector<8x8xi32> to vector<8x1xi32>
    %12 = vector.broadcast %11 : vector<8x1xi32> to vector<8x16xi32>
    %13 = arith.cmpi eq, %12, %4 : vector<8x16xi32>
    %14 = arith.extui %13 : vector<8x16xi1> to vector<8x16xi32>
    %15 = arith.sitofp %14 : vector<8x16xi32> to vector<8x16xf32>
    %cst_5 = arith.constant dense<0.000000e+00> : vector<8x128xf32>
    %16 = tpu.matmul %15, %1, %cst_5 {dimension_numbers = #tpu.dot_dimension_numbers<[1], [0], [0], [1], [0, 0, 1, 1], [], []>} : vector<8x16xf32>, vector<16x128xf32>, vector<8x128xf32> -> vector<8x128xf32>
    %17 = arith.maximumf %10, %16 : vector<8x128xf32>
    %18 = vector.extract_strided_slice %3 {offsets = [0, 2], sizes = [8, 1], strides = [1, 1]} : vector<8x8xi32> to vector<8x1xi32>
    %19 = vector.broadcast %18 : vector<8x1xi32> to vector<8x16xi32>
    %20 = arith.cmpi eq, %19, %4 : vector<8x16xi32>
    %21 = arith.extui %20 : vector<8x16xi1> to vector<8x16xi32>
    %22 = arith.sitofp %21 : vector<8x16xi32> to vector<8x16xf32>
    %cst_6 = arith.constant dense<0.000000e+00> : vector<8x128xf32>
    %23 = tpu.matmul %22, %1, %cst_6 {dimension_numbers = #tpu.dot_dimension_numbers<[1], [0], [0], [1], [0, 0, 1, 1], [], []>} : vector<8x16xf32>, vector<16x128xf32>, vector<8x128xf32> -> vector<8x128xf32>
    %24 = arith.maximumf %17, %23 : vector<8x128xf32>
    %25 = vector.extract_strided_slice %3 {offsets = [0, 3], sizes = [8, 1], strides = [1, 1]} : vector<8x8xi32> to vector<8x1xi32>
    %26 = vector.broadcast %25 : vector<8x1xi32> to vector<8x16xi32>
    %27 = arith.cmpi eq, %26, %4 : vector<8x16xi32>
    %28 = arith.extui %27 : vector<8x16xi1> to vector<8x16xi32>
    %29 = arith.sitofp %28 : vector<8x16xi32> to vector<8x16xf32>
    %cst_7 = arith.constant dense<0.000000e+00> : vector<8x128xf32>
    %30 = tpu.matmul %29, %1, %cst_7 {dimension_numbers = #tpu.dot_dimension_numbers<[1], [0], [0], [1], [0, 0, 1, 1], [], []>} : vector<8x16xf32>, vector<16x128xf32>, vector<8x128xf32> -> vector<8x128xf32>
    %31 = arith.maximumf %24, %30 : vector<8x128xf32>
    %32 = vector.extract_strided_slice %3 {offsets = [0, 4], sizes = [8, 1], strides = [1, 1]} : vector<8x8xi32> to vector<8x1xi32>
    %33 = vector.broadcast %32 : vector<8x1xi32> to vector<8x16xi32>
    %34 = arith.cmpi eq, %33, %4 : vector<8x16xi32>
    %35 = arith.extui %34 : vector<8x16xi1> to vector<8x16xi32>
    %36 = arith.sitofp %35 : vector<8x16xi32> to vector<8x16xf32>
    %cst_8 = arith.constant dense<0.000000e+00> : vector<8x128xf32>
    %37 = tpu.matmul %36, %1, %cst_8 {dimension_numbers = #tpu.dot_dimension_numbers<[1], [0], [0], [1], [0, 0, 1, 1], [], []>} : vector<8x16xf32>, vector<16x128xf32>, vector<8x128xf32> -> vector<8x128xf32>
    %38 = arith.maximumf %31, %37 : vector<8x128xf32>
    %39 = vector.extract_strided_slice %3 {offsets = [0, 5], sizes = [8, 1], strides = [1, 1]} : vector<8x8xi32> to vector<8x1xi32>
    %40 = vector.broadcast %39 : vector<8x1xi32> to vector<8x16xi32>
    %41 = arith.cmpi eq, %40, %4 : vector<8x16xi32>
    %42 = arith.extui %41 : vector<8x16xi1> to vector<8x16xi32>
    %43 = arith.sitofp %42 : vector<8x16xi32> to vector<8x16xf32>
    %cst_9 = arith.constant dense<0.000000e+00> : vector<8x128xf32>
    %44 = tpu.matmul %43, %1, %cst_9 {dimension_numbers = #tpu.dot_dimension_numbers<[1], [0], [0], [1], [0, 0, 1, 1], [], []>} : vector<8x16xf32>, vector<16x128xf32>, vector<8x128xf32> -> vector<8x128xf32>
    %45 = arith.maximumf %38, %44 : vector<8x128xf32>
    %46 = vector.extract_strided_slice %3 {offsets = [0, 6], sizes = [8, 1], strides = [1, 1]} : vector<8x8xi32> to vector<8x1xi32>
    %47 = vector.broadcast %46 : vector<8x1xi32> to vector<8x16xi32>
    %48 = arith.cmpi eq, %47, %4 : vector<8x16xi32>
    %49 = arith.extui %48 : vector<8x16xi1> to vector<8x16xi32>
    %50 = arith.sitofp %49 : vector<8x16xi32> to vector<8x16xf32>
    %cst_10 = arith.constant dense<0.000000e+00> : vector<8x128xf32>
    %51 = tpu.matmul %50, %1, %cst_10 {dimension_numbers = #tpu.dot_dimension_numbers<[1], [0], [0], [1], [0, 0, 1, 1], [], []>} : vector<8x16xf32>, vector<16x128xf32>, vector<8x128xf32> -> vector<8x128xf32>
    %52 = arith.maximumf %45, %51 : vector<8x128xf32>
    %53 = vector.extract_strided_slice %3 {offsets = [0, 7], sizes = [8, 1], strides = [1, 1]} : vector<8x8xi32> to vector<8x1xi32>
    %54 = vector.broadcast %53 : vector<8x1xi32> to vector<8x16xi32>
    %55 = arith.cmpi eq, %54, %4 : vector<8x16xi32>
    %56 = arith.extui %55 : vector<8x16xi1> to vector<8x16xi32>
    %57 = arith.sitofp %56 : vector<8x16xi32> to vector<8x16xf32>
    %cst_11 = arith.constant dense<0.000000e+00> : vector<8x128xf32>
    %58 = tpu.matmul %57, %1, %cst_11 {dimension_numbers = #tpu.dot_dimension_numbers<[1], [0], [0], [1], [0, 0, 1, 1], [], []>} : vector<8x16xf32>, vector<16x128xf32>, vector<8x128xf32> -> vector<8x128xf32>
    %59 = arith.maximumf %52, %58 : vector<8x128xf32>
    %c0_12 = arith.constant 0 : index
    %c0_13 = arith.constant 0 : index
    %c0_14 = arith.constant 0 : index
    %60 = vector.load %arg3[%c0_12, %c0_13, %c0_14] : memref<1x8x128xf32, #tpu.memory_space<vmem>>, vector<1x8x128xf32>
    %61 = vector.shape_cast %60 : vector<1x8x128xf32> to vector<8x128xf32>
    %c0_15 = arith.constant 0 : index
    %c0_16 = arith.constant 0 : index
    %62 = vector.load %arg5[%c0_15, %c0_16] : memref<128x128xf32, #tpu.memory_space<vmem>>, vector<128x128xf32>
    %cst_17 = arith.constant dense<0.000000e+00> : vector<8x128xf32>
    %63 = tpu.matmul %61, %62, %cst_17 {dimension_numbers = #tpu.dot_dimension_numbers<[1], [0], [0], [1], [0, 0, 1, 1], [], []>} : vector<8x128xf32>, vector<128x128xf32>, vector<8x128xf32> -> vector<8x128xf32>
    %c0_18 = arith.constant 0 : index
    %c0_19 = arith.constant 0 : index
    %64 = vector.load %arg6[%c0_18, %c0_19] : memref<128x128xf32, #tpu.memory_space<vmem>>, vector<128x128xf32>
    %cst_20 = arith.constant dense<0.000000e+00> : vector<8x128xf32>
    %65 = tpu.matmul %59, %64, %cst_20 {dimension_numbers = #tpu.dot_dimension_numbers<[1], [0], [0], [1], [0, 0, 1, 1], [], []>} : vector<8x128xf32>, vector<128x128xf32>, vector<8x128xf32> -> vector<8x128xf32>
    %66 = arith.addf %63, %65 : vector<8x128xf32>
    %c0_21 = arith.constant 0 : index
    %c0_22 = arith.constant 0 : index
    %67 = vector.load %arg7[%c0_21, %c0_22] : memref<1x128xf32, #tpu.memory_space<vmem>>, vector<1x128xf32>
    %68 = vector.broadcast %67 : vector<1x128xf32> to vector<8x128xf32>
    %69 = arith.addf %66, %68 : vector<8x128xf32>
    %cst_23 = arith.constant 0.000000e+00 : f32
    %70 = vector.broadcast %cst_23 : f32 to vector<8x128xf32>
    %71 = arith.maximumf %69, %70 : vector<8x128xf32>
    %c0_24 = arith.constant 0 : index
    %c0_25 = arith.constant 0 : index
    %c0_26 = arith.constant 0 : index
    %72 = vector.load %arg8[%c0_24, %c0_25, %c0_26] : memref<1x8x128xf32, #tpu.memory_space<vmem>>, vector<1x8x128xf32>
    %73 = vector.shape_cast %72 : vector<1x8x128xf32> to vector<8x128xf32>
    %74 = vector.shape_cast %71 : vector<8x128xf32> to vector<1x8x128xf32>
    tpu.vector_store %arg8[%c0_24, %c0_25, %c0_26], %74 {strides = array<i32>} : memref<1x8x128xf32, #tpu.memory_space<vmem>>, vector<1x8x128xf32>,
    return
  }
  func.func @transform_0(%arg0: i32, %arg1: i32) -> (i32, i32, i32) {
    %c0_i32 = arith.constant 0 : i32
    %c0_i32_0 = arith.constant 0 : i32
    %c0_i32_1 = arith.constant 0 : i32
    return %arg0, %c0_i32, %c0_i32_0 : i32, i32, i32
  }
  func.func @transform_1(%arg0: i32, %arg1: i32) -> (i32, i32, i32) {
    %c0_i32 = arith.constant 0 : i32
    %c0_i32_0 = arith.constant 0 : i32
    return %arg0, %arg1, %c0_i32 : i32, i32, i32
  }
  func.func @transform_2(%arg0: i32, %arg1: i32) -> (i32, i32, i32) {
    %c0_i32 = arith.constant 0 : i32
    %c0_i32_0 = arith.constant 0 : i32
    return %arg0, %arg1, %c0_i32 : i32, i32, i32
  }
  func.func @transform_3(%arg0: i32, %arg1: i32) -> (i32, i32) {
    %c0_i32 = arith.constant 0 : i32
    %c0_i32_0 = arith.constant 0 : i32
    %c0_i32_1 = arith.constant 0 : i32
    return %c0_i32, %c0_i32_0 : i32, i32
  }
  func.func @transform_4(%arg0: i32, %arg1: i32) -> (i32, i32) {
    %c0_i32 = arith.constant 0 : i32
    %c0_i32_0 = arith.constant 0 : i32
    %c0_i32_1 = arith.constant 0 : i32
    return %c0_i32, %c0_i32_0 : i32, i32
  }
  func.func @transform_5(%arg0: i32, %arg1: i32) -> (i32, i32) {
    %c0_i32 = arith.constant 0 : i32
    %c0_i32_0 = arith.constant 0 : i32
    %c0_i32_1 = arith.constant 0 : i32
    return %c0_i32, %c0_i32_0 : i32, i32
  }
  func.func @transform_6(%arg0: i32, %arg1: i32) -> (i32, i32, i32) {
    %c0_i32 = arith.constant 0 : i32
    %c0_i32_0 = arith.constant 0 : i32
    return %arg0, %arg1, %c0_i32 : i32, i32, i32
  }
}

</mosaic_0001>

<llo_original>
// kernel: tpu_custom_call.1
$region0: #{tpu_custom_call.1}
  #allocation0 [shape = 'u32[]', space=smem, size = 0x4, offset = 0x4, fixed_abs, tag = 'smem constant byte address 0x4 - core index']
  #allocation1 [shape = 'u32[144,128]{1,0:T(1,128)}', space=vmem, size = 0x12000, scoped, tag = 'internal scratch']
  %s0 = inlined_call_operand.vmem [shape: f32[2,16,128], index: 0, kind: input, shape index: {}]
  %s1 = inlined_call_operand.hbm [shape: f32[2,16,128], index: 1, kind: input, shape index: {}]
  %s2 = inlined_call_operand.vmem [shape: s32[2,16,8], index: 2, kind: input, shape index: {}]
  %s3 = inlined_call_operand.hbm [shape: f32[128,128], index: 3, kind: input, shape index: {}]
  %s4 = inlined_call_operand.hbm [shape: f32[128,128], index: 4, kind: input, shape index: {}]
  %s5 = inlined_call_operand.vmem [shape: f32[1,128], index: 5, kind: input, shape index: {}]
  %s6 = inlined_call_operand.hbm [shape: f32[2,16,128], index: 6, kind: output, shape index: {}]
  %s7 = sld [smem:[#allocation0]]
  $region69: #{tpu_custom_call.1} parent=0
    _
  %s9 = ssub.s32 1, %s7
  %s10 = scalar_select 0, %s9, %s7
  $region1: #{tpu_custom_call.1} parent=0
    #allocation2 [shape = 'u8[8192]{0}', space=vmem, size = 0x2000, scoped, tag = 'input window, operand 1']
    #allocation3 [shape = 's32[2]{0}', space=sflag, size = 0x8, scoped, tag = 'scoped memory for tpu_custom_call.1']
    #allocation4 [shape = 's32[2]{0}', space=sflag, size = 0x8, scoped, tag = 'scoped memory for tpu_custom_call.1']
    #allocation5 [shape = 'u8[65536]{0}', space=vmem, size = 0x10000, scoped, tag = 'input window, operand 3, single buffered']
    #allocation6 [shape = 's32[1]{0}', space=sflag, size = 0x4, scoped, tag = 'scoped memory for tpu_custom_call.1']
    #allocation7 [shape = 'u8[65536]{0}', space=vmem, size = 0x10000, scoped, tag = 'input window, operand 4, single buffered']
    #allocation8 [shape = 'u8[8192]{0}', space=vmem, size = 0x2000, scoped, tag = 'output window, operand 0']
    %11 = vsyncpa [#allocation3], 0
    %s12 = scalar_lea.sflag [#allocation3], 1
    %13 = vsyncpa %s12, 0
    %14 = vsyncpa [#allocation6], 0
    %15 = vsyncpa [#allocation4], 0
    %s16 = scalar_lea.sflag [#allocation4], 1
    %17 = vsyncpa %s16, 0
    loop: start=0, step=1, limit=6
    $region2: #{tpu_custom_call.1} parent=1 // loop_pre_header
      _
    $region3: #{tpu_custom_call.1} parent=1 // loop_header
      %s19 = sphi 0, %s23
      %p20 = scmp.ge.s32.totalorder %s19, 6
      %s26 = sphi 0, %s38
      %s27 = sphi 0, %s34
      %s28 = sphi 0, %s26
      %s29 = sphi 0, %s27
      %s30 = sphi 0, %s28
      %s31 = sphi 0, %s29
      %s41 = sphi 0, %s43
      %s44 = sphi 0, %s41
      %s45 = sphi 0, %s44
      %s61 = sphi 0, %s45
      %s69 = sphi 0, %s71
      %s72 = sphi 0, %s69
      %s73 = sphi 0, %s72
      %s89 = sphi 0, %s73
      %s97 = sphi 0, %s99
      %s100 = sphi 0, %s97
      %s101 = sphi 0, %s100
      %s117 = sphi 0, %s101
      %s121 = sphi 0, %s121
      %s123 = sphi 0, %s121
      %s124 = sphi 0, %s123
      %s138 = sphi 0, %s124
      %s142 = sphi 0, %s142
      %s144 = sphi 0, %s142
      %s145 = sphi 0, %s144
      %s159 = sphi 0, %s145
      %s163 = sphi 0, %s163
      %s165 = sphi 0, %s163
      %s166 = sphi 0, %s165
      %s180 = sphi 0, %s166
      %s188 = sphi 0, %s190
      %s191 = sphi 0, %s188
      %s192 = sphi 0, %s191
      %s208 = sphi 0, %s192
    $region4: #{tpu_custom_call.1} parent=1 // loop_header_branch
      %22 = sbr.rel (%p20) target = $region8
    $region5: #{tpu_custom_call.1} parent=1 // loop_body
      %s24 = ssub.s32 %s19, 1
      %s25 = ssub.s32 %s19, 2
      %s32 = sadd.s32 1, %s27
      %p33 = scmp.ge.s32.totalorder %s32, 2
      %s34 = scalar_select %p33, 0, %s32
      %s35 = sadd.s32 1, %s26
      %s36 = scalar_select %p33, %s35, %s26
      %p37 = scmp.ge.s32.totalorder %s36, 2
      %s38 = scalar_select %p37, 0, %s36
      %s39 = ssub.s32 %s26, %s38
      %p40 = scmp.eq.s32.totalorder %s39, 0
      %s42 = sadd.s32 %s41, 1
      %s43 = scalar_select %p40, %s41, %s42
      %p46 = pneg %p40
      %p47 = scmp.eq.s32.totalorder %s19, 3
      %p48 = por %p46, %p47
      %p49 = scmp.ne.s32.totalorder %s41, %s44
      %p50 = scmp.eq.s32.totalorder %s19, 0
      %p51 = por %p49, %p50
      %p52 = scmp.ne.s32.totalorder %s41, %s44
      %p53 = scmp.eq.s32.totalorder %s24, 3
      %p54 = por %p52, %p53
      %p55 = scmp.ne.s32.totalorder %s44, %s45
      %p56 = scmp.eq.s32.totalorder %s24, 0
      %p57 = por %p55, %p56
      %p58 = scmp.ne.s32.totalorder %s44, %s45
      %p59 = scmp.eq.s32.totalorder %s25, 3
      %p60 = por %p58, %p59
      %p62 = scmp.ne.s32.totalorder %s45, %s61
      %p63 = scmp.eq.s32.totalorder %s25, 0
      %p64 = por %p62, %p63
      %s65 = ssub.s32 %s26, %s38
      %s66 = ssub.s32 %s27, %s34
      %s67 = sor.u32 %s65, %s66
      %p68 = scmp.eq.s32.totalorder %s67, 0
      %s70 = sadd.s32 %s69, 1
      %s71 = scalar_select %p68, %s69, %s70
      %p74 = pneg %p68
      %p75 = scmp.eq.s32.totalorder %s19, 3
      %p76 = por %p74, %p75
      %p77 = scmp.ne.s32.totalorder %s69, %s72
      %p78 = scmp.eq.s32.totalorder %s19, 0
      %p79 = por %p77, %p78
      %p80 = scmp.ne.s32.totalorder %s69, %s72
      %p81 = scmp.eq.s32.totalorder %s24, 3
      %p82 = por %p80, %p81
      %p83 = scmp.ne.s32.totalorder %s72, %s73
      %p84 = scmp.eq.s32.totalorder %s24, 0
      %p85 = por %p83, %p84
      %p86 = scmp.ne.s32.totalorder %s72, %s73
      %p87 = scmp.eq.s32.totalorder %s25, 3
      %p88 = por %p86, %p87
      %p90 = scmp.ne.s32.totalorder %s73, %s89
      %p91 = scmp.eq.s32.totalorder %s25, 0
      %p92 = por %p90, %p91
      %s93 = ssub.s32 %s26, %s38
      %s94 = ssub.s32 %s27, %s34
      %s95 = sor.u32 %s93, %s94
      %p96 = scmp.eq.s32.totalorder %s95, 0
      %s98 = sadd.s32 %s97, 1
      %s99 = scalar_select %p96, %s97, %s98
      %p102 = pneg %p96
      %p103 = scmp.eq.s32.totalorder %s19, 3
      %p104 = por %p102, %p103
      %p105 = scmp.ne.s32.totalorder %s97, %s100
      %p106 = scmp.eq.s32.totalorder %s19, 0
      %p107 = por %p105, %p106
      %p108 = scmp.ne.s32.totalorder %s97, %s100
      %p109 = scmp.eq.s32.totalorder %s24, 3
      %p110 = por %p108, %p109
      %p111 = scmp.ne.s32.totalorder %s100, %s101
      %p112 = scmp.eq.s32.totalorder %s24, 0
      %p113 = por %p111, %p112
      %p114 = scmp.ne.s32.totalorder %s100, %s101
      %p115 = scmp.eq.s32.totalorder %s25, 3
      %p116 = por %p114, %p115
      %p118 = scmp.ne.s32.totalorder %s101, %s117
      %p119 = scmp.eq.s32.totalorder %s25, 0
      %p120 = por %p118, %p119
      %s122 = sadd.s32 %s121, 1
      %p125 = scmp.eq.s32.totalorder %s19, 3
      %p126 = scmp.ne.s32.totalorder %s121, %s123
      %p127 = scmp.eq.s32.totalorder %s19, 0
      %p128 = por %p126, %p127
      %p129 = scmp.ne.s32.totalorder %s121, %s123
      %p130 = scmp.eq.s32.totalorder %s24, 3
      %p131 = por %p129, %p130
      %p132 = scmp.ne.s32.totalorder %s123, %s124
      %p133 = scmp.eq.s32.totalorder %s24, 0
      %p134 = por %p132, %p133
      %p135 = scmp.ne.s32.totalorder %s123, %s124
      %p136 = scmp.eq.s32.totalorder %s25, 3
      %p137 = por %p135, %p136
      %p139 = scmp.ne.s32.totalorder %s124, %s138
      %p140 = scmp.eq.s32.totalorder %s25, 0
      %p141 = por %p139, %p140
      %s143 = sadd.s32 %s142, 1
      %p146 = scmp.eq.s32.totalorder %s19, 3
      %p147 = scmp.ne.s32.totalorder %s142, %s144
      %p148 = scmp.eq.s32.totalorder %s19, 0
      %p149 = por %p147, %p148
      %p150 = scmp.ne.s32.totalorder %s142, %s144
      %p151 = scmp.eq.s32.totalorder %s24, 3
      %p152 = por %p150, %p151
      %p153 = scmp.ne.s32.totalorder %s144, %s145
      %p154 = scmp.eq.s32.totalorder %s24, 0
      %p155 = por %p153, %p154
      %p156 = scmp.ne.s32.totalorder %s144, %s145
      %p157 = scmp.eq.s32.totalorder %s25, 3
      %p158 = por %p156, %p157
      %p160 = scmp.ne.s32.totalorder %s145, %s159
      %p161 = scmp.eq.s32.totalorder %s25, 0
      %p162 = por %p160, %p161
      %s164 = sadd.s32 %s163, 1
      %p167 = scmp.eq.s32.totalorder %s19, 3
      %p168 = scmp.ne.s32.totalorder %s163, %s165
      %p169 = scmp.eq.s32.totalorder %s19, 0
      %p170 = por %p168, %p169
      %p171 = scmp.ne.s32.totalorder %s163, %s165
      %p172 = scmp.eq.s32.totalorder %s24, 3
      %p173 = por %p171, %p172
      %p174 = scmp.ne.s32.totalorder %s165, %s166
      %p175 = scmp.eq.s32.totalorder %s24, 0
      %p176 = por %p174, %p175
      %p177 = scmp.ne.s32.totalorder %s165, %s166
      %p178 = scmp.eq.s32.totalorder %s25, 3
      %p179 = por %p177, %p178
      %p181 = scmp.ne.s32.totalorder %s166, %s180
      %p182 = scmp.eq.s32.totalorder %s25, 0
      %p183 = por %p181, %p182
      %s184 = ssub.s32 %s26, %s38
      %s185 = ssub.s32 %s27, %s34
      %s186 = sor.u32 %s184, %s185
      %p187 = scmp.eq.s32.totalorder %s186, 0
      %s189 = sadd.s32 %s188, 1
      %s190 = scalar_select %p187, %s188, %s189
      %p193 = pneg %p187
      %p194 = scmp.eq.s32.totalorder %s19, 3
      %p195 = por %p193, %p194
      %p196 = scmp.ne.s32.totalorder %s188, %s191
      %p197 = scmp.eq.s32.totalorder %s19, 0
      %p198 = por %p196, %p197
      %p199 = scmp.ne.s32.totalorder %s188, %s191
      %p200 = scmp.eq.s32.totalorder %s24, 3
      %p201 = por %p199, %p200
      %p202 = scmp.ne.s32.totalorder %s191, %s192
      %p203 = scmp.eq.s32.totalorder %s24, 0
      %p204 = por %p202, %p203
      %p205 = scmp.ne.s32.totalorder %s191, %s192
      %p206 = scmp.eq.s32.totalorder %s25, 3
      %p207 = por %p205, %p206
      %p209 = scmp.ne.s32.totalorder %s192, %s208
      %p210 = scmp.eq.s32.totalorder %s25, 0
      %p211 = por %p209, %p210
      %p212 = scmp.le.s32.totalorder 1, %s19
      %p213 = scmp.lt.s32.totalorder %s19, 5
      %p214 = pnand %p212, %p213
      %p215 = pneg %p214
      // Predicated region
      $region9: #{tpu_custom_call.1} parent=5 // pred_check
        _
      $region10: #{tpu_custom_call.1} parent=5 // pred_check_branch
        %217 = sbr.rel (%p214) target = $region12
      $region11: #{tpu_custom_call.1} parent=5 // pred_region
        %s218 = ssub.s32 %s19, 1
        // Predicated region
        $region13: #{tpu_custom_call.1} parent=11 // pred_check
          %p219 = pneg %p134
        $region14: #{tpu_custom_call.1} parent=11 // pred_check_branch
          %221 = sbr.rel (%p219) target = $region16
        $region15: #{tpu_custom_call.1} parent=11 // pred_region
          %s223 = ssub.s32 2048, 2048
          %224 = vsyncadd [#allocation6], %s223
          %s225 = sshll.u32 [#allocation5], 4
          %s226 = int_to_ptr.vmem [resolvable:$true] %s225
          %231 = dma.hbm_to_vmem [thread:$0]  %s3, 2048, %s226, [#allocation6], 128, 128, 8
        $region16: #{tpu_custom_call.1} parent=11 // pred_fallthru
          _
        // Predicated region
        $region17: #{tpu_custom_call.1} parent=11 // pred_check
          %p232 = pneg %p155
        $region18: #{tpu_custom_call.1} parent=11 // pred_check_branch
          %234 = sbr.rel (%p232) target = $region20
        $region19: #{tpu_custom_call.1} parent=11 // pred_region
          %s236 = ssub.s32 2048, 2048
          %237 = vsyncadd [#allocation6], %s236
          %s238 = sshll.u32 [#allocation7], 4
          %s239 = int_to_ptr.vmem [resolvable:$true] %s238
          %244 = dma.hbm_to_vmem [thread:$0]  %s4, 2048, %s239, [#allocation6], 128, 128, 8
        $region20: #{tpu_custom_call.1} parent=11 // pred_fallthru
          _
        // Predicated region
        $region21: #{tpu_custom_call.1} parent=11 // pred_check
          %p245 = pneg %p176
        $region22: #{tpu_custom_call.1} parent=11 // pred_check_branch
          %247 = sbr.rel (%p245) target = $region24
        $region23: #{tpu_custom_call.1} parent=11 // pred_region
          _
        $region24: #{tpu_custom_call.1} parent=11 // pred_fallthru
          _
      $region12: #{tpu_custom_call.1} parent=5 // pred_fallthru
        _
      %p248 = scmp.lt.s32.totalorder %s19, 4
      // Predicated region
      $region25: #{tpu_custom_call.1} parent=5 // pred_check
        %p249 = pneg %p248
      $region26: #{tpu_custom_call.1} parent=5 // pred_check_branch
        %251 = sbr.rel (%p249) target = $region28
      $region27: #{tpu_custom_call.1} parent=5 // pred_region
        // Predicated region
        $region29: #{tpu_custom_call.1} parent=27 // pred_check
          %p252 = pneg %p51
        $region30: #{tpu_custom_call.1} parent=27 // pred_check_branch
          %254 = sbr.rel (%p252) target = $region32
        $region31: #{tpu_custom_call.1} parent=27 // pred_region
          %p255 = scmp.lt.s32.totalorder %s26, 1
          %s256 = scalar_select %p255, %s26, 1
          %s257 = smul.addr %s256, 2
          %s258 = smul.addr %s257, 8
          %s259 = scalar_lea.vmem %s0, %s258
        $region32: #{tpu_custom_call.1} parent=27 // pred_fallthru
          _
        // Predicated region
        $region33: #{tpu_custom_call.1} parent=27 // pred_check
          %p260 = pneg %p79
        $region34: #{tpu_custom_call.1} parent=27 // pred_check_branch
          %262 = sbr.rel (%p260) target = $region36
        $region35: #{tpu_custom_call.1} parent=27 // pred_region
          %s263 = sand.u32 %s69, 1
          %s264 = scalar_lea.sflag [#allocation3], %s263
          %s265 = sand.u32 %s69, 1
          %s266 = smul.addr %s265, 8
          %s267 = scalar_lea.vmem [#allocation2], %s266
          %s269 = ssub.s32 128, 128
          %270 = vsyncadd %s264, %s269
          %s271 = smul.addr %s26, 2
          %s272 = sadd.s32 %s27, %s271
          %s273 = smul.addr %s272, 128
          %s274 = scalar_lea.hbm %s1, %s273
          %s276 = sshll.u32 %s267, 4
          %s277 = int_to_ptr.vmem [resolvable:$true] %s276
          %279 = dma.hbm_to_vmem [thread:$0]  %s274, 128, %s277, %s264
        $region36: #{tpu_custom_call.1} parent=27 // pred_fallthru
          _
        // Predicated region
        $region37: #{tpu_custom_call.1} parent=27 // pred_check
          %p280 = pneg %p107
        $region38: #{tpu_custom_call.1} parent=27 // pred_check_branch
          %282 = sbr.rel (%p280) target = $region40
        $region39: #{tpu_custom_call.1} parent=27 // pred_region
          %p283 = scmp.lt.s32.totalorder %s26, 1
          %s284 = scalar_select %p283, %s26, 1
          %p285 = scmp.lt.s32.totalorder %s27, 1
          %s286 = scalar_select %p285, %s27, 1
          %s287 = smul.addr %s284, 2
          %s288 = sadd.s32 %s286, %s287
          %s289 = smul.addr %s288, 8
          %s290 = scalar_lea.vmem %s2, %s289
        $region40: #{tpu_custom_call.1} parent=27 // pred_fallthru
          _
      $region28: #{tpu_custom_call.1} parent=5 // pred_fallthru
        _
      %p291 = scmp.le.s32.totalorder 1, %s19
      %p292 = scmp.lt.s32.totalorder %s19, 5
      %p293 = pnand %p291, %p292
      %p294 = pneg %p293
      // Predicated region
      $region41: #{tpu_custom_call.1} parent=5 // pred_check
        _
      $region42: #{tpu_custom_call.1} parent=5 // pred_check_branch
        %296 = sbr.rel (%p293) target = $region44
      $region43: #{tpu_custom_call.1} parent=5 // pred_region
        %s297 = ssub.s32 %s19, 1
        %s298 = sand.u32 %s72, 1
        %s299 = scalar_lea.sflag [#allocation3], %s298
        %s300 = sand.u32 %s72, 1
        %s301 = smul.addr %s300, 8
        %s302 = scalar_lea.vmem [#allocation2], %s301
        // Predicated region
        $region45: #{tpu_custom_call.1} parent=43 // pred_check
          %p303 = pneg %p85
        $region46: #{tpu_custom_call.1} parent=43 // pred_check_branch
          %305 = sbr.rel (%p303) target = $region48
        $region47: #{tpu_custom_call.1} parent=43 // pred_region
          %306 = dma.done %s299, 128
        $region48: #{tpu_custom_call.1} parent=43 // pred_fallthru
          _
        // Predicated region
        $region49: #{tpu_custom_call.1} parent=43 // pred_check
          %p307 = pneg %p134
        $region50: #{tpu_custom_call.1} parent=43 // pred_check_branch
          %309 = sbr.rel (%p307) target = $region52
        $region51: #{tpu_custom_call.1} parent=43 // pred_region
          %310 = dma.done [#allocation6], 2048
        $region52: #{tpu_custom_call.1} parent=43 // pred_fallthru
          _
        // Predicated region
        $region53: #{tpu_custom_call.1} parent=43 // pred_check
          %p311 = pneg %p155
        $region54: #{tpu_custom_call.1} parent=43 // pred_check_branch
          %313 = sbr.rel (%p311) target = $region56
        $region55: #{tpu_custom_call.1} parent=43 // pred_region
          %314 = dma.done [#allocation6], 2048
        $region56: #{tpu_custom_call.1} parent=43 // pred_fallthru
          _
        %p315 = scmp.lt.s32.totalorder %s28, 1
        %s316 = scalar_select %p315, %s28, 1
        %s317 = smul.addr %s316, 2
        %s318 = smul.addr %s317, 8
        %s319 = scalar_lea.vmem %s0, %s318
        %p320 = pneg %p57
        %p321 = pneg %p54
        %s322 = sand.u32 %s72, 1
        %s323 = scalar_lea.sflag [#allocation3], %s322
        %s324 = sand.u32 %s72, 1
        %s325 = smul.addr %s324, 8
        %s326 = scalar_lea.vmem [#allocation2], %s325
        %p327 = pneg %p85
        %p328 = pneg %p82
        %p329 = scmp.lt.s32.totalorder %s28, 1
        %s330 = scalar_select %p329, %s28, 1
        %p331 = scmp.lt.s32.totalorder %s29, 1
        %s332 = scalar_select %p331, %s29, 1
        %s333 = smul.addr %s330, 2
        %s334 = sadd.s32 %s332, %s333
        %s335 = smul.addr %s334, 8
        %s336 = scalar_lea.vmem %s2, %s335
        %p337 = pneg %p113
        %p338 = pneg %p110
        %p339 = pneg %p134
        %p340 = pneg %p131
        %p341 = pneg %p155
        %p342 = pneg %p152
        %p343 = pneg %p176
        %p344 = pneg %p173
        %p345 = pneg %p204
        %p346 = pneg %p201
        %s347 = sand.u32 %s191, 1
        %s348 = scalar_lea.sflag [#allocation4], %s347
        %s349 = sand.u32 %s191, 1
        %s350 = smul.addr %s349, 8
        %s351 = scalar_lea.vmem [#allocation8], %s350
        %p352 = scmp.lt.s32.totalorder %s28, 1
        %s353 = scalar_select %p352, %s28, 1
        %s354 = smul.addr %s353, 2
        %s355 = smul.addr %s354, 8
        %s356 = scalar_lea.vmem %s0, %s355
        %p357 = scmp.lt.s32.totalorder %s28, 1
        %s358 = scalar_select %p357, %s28, 1
        %p359 = scmp.lt.s32.totalorder %s29, 1
        %s360 = scalar_select %p359, %s29, 1
        %s361 = smul.addr %s358, 2
        %s362 = sadd.s32 %s360, %s361
        %s363 = smul.addr %s362, 8
        %s364 = scalar_lea.vmem %s2, %s363
        %v365 = vld [vmem:[%s356] sm:$0xff]
        %v366 = vld [vmem:[%s356 + $0x8] sm:$0xff]
        %v367 = vld [vmem:[%s364] sm:$0xff]
        %v368 = vlaneseq
        %v369 = vand.u32 %v368, 127
        %370 = vset.pattern.permute.xlu0 0
        %371 = vperm.xlu0 %370, %v367
        %v372 = vpop.permute.xlu0 %371
        %vm373 = vcmp.eq.s32.totalorder %v372, %v369
        %v374 = vsel %vm373, 1, 0
        %v375 = vcvt.s32.f32 %v374
        %vm376 = vcmask 130048
        %v378 = vsel %vm376, %v375, 0
        %380 = vmatprep.subr.mxu0 0.0
        %381 = vmatpush1.msra.mxu0 0.0
        %382 = vmatprep.subr.mxu0 0.0
        %383 = vmatpush1.msra.mxu0 0.0
        %384 = vmatprep.subr.mxu0 0.0
        %385 = vmatpush1.msra.mxu0 0.0
        %386 = vmatprep.subr.mxu0 0.0
        %387 = vmatpush1.msra.mxu0 0.0
        %388 = vmatprep.subr.mxu0 0.0
        %389 = vmatpush1.msra.mxu0 0.0
        %390 = vmatprep.subr.mxu0 0.0
        %391 = vmatpush1.msra.mxu0 0.0
        %392 = vmatprep.subr.mxu0 0.0
        %393 = vmatpush1.msra.mxu0 0.0
        %394 = vmatprep.subr.mxu0 0.0
        %395 = vmatpush1.msra.mxu0 0.0
        %396 = vmatprep.subr.mxu0 0.0
        %397 = vmatpush1.msra.mxu0 0.0
        %398 = vmatprep.subr.mxu0 0.0
        %399 = vmatpush1.msra.mxu0 0.0
        %400 = vmatprep.subr.mxu0 0.0
        %401 = vmatpush1.msra.mxu0 0.0
        %402 = vmatprep.subr.mxu0 0.0
        %403 = vmatpush1.msra.mxu0 0.0
        %404 = vmatprep.subr.mxu0 0.0
        %405 = vmatpush1.msra.mxu0 0.0
        %406 = vmatprep.subr.mxu0 0.0
        %407 = vmatpush1.msra.mxu0 0.0
        %408 = vmatprep.subr.mxu0 0.0
        %409 = vmatpush1.msra.mxu0 %v366
        %410 = vmatprep.subr.mxu0 0.0
        %411 = vmatpush1.msra.mxu0 %v365
        %412 = vmatprep.subr.mxu0 0.0
        %413 = vmatpush2.msra.mxu0 0.0
        %414 = vmatprep.subr.mxu0 0.0
        %415 = vmatpush2.msra.mxu0 0.0
        %416 = vmatprep.subr.mxu0 0.0
        %417 = vmatpush2.msra.mxu0 0.0
        %418 = vmatprep.subr.mxu0 0.0
        %419 = vmatpush2.msra.mxu0 0.0
        %420 = vmatprep.subr.mxu0 0.0
        %421 = vmatpush2.msra.mxu0 0.0
        %422 = vmatprep.subr.mxu0 0.0
        %423 = vmatpush2.msra.mxu0 0.0
        %424 = vmatprep.subr.mxu0 0.0
        %425 = vmatpush2.msra.mxu0 0.0
        %426 = vmatprep.subr.mxu0 0.0
        %427 = vmatpush2.msra.mxu0 0.0
        %428 = vmatprep.subr.mxu0 0.0
        %429 = vmatpush2.msra.mxu0 0.0
        %430 = vmatprep.subr.mxu0 0.0
        %431 = vmatpush2.msra.mxu0 0.0
        %432 = vmatprep.subr.mxu0 0.0
        %433 = vmatpush2.msra.mxu0 0.0
        %434 = vmatprep.subr.mxu0 0.0
        %435 = vmatpush2.msra.mxu0 0.0
        %436 = vmatprep.subr.mxu0 0.0
        %437 = vmatpush2.msra.mxu0 0.0
        %438 = vmatprep.subr.mxu0 0.0
        %439 = vmatpush2.msra.mxu0 0.0
        %440 = vmatprep.subr.mxu0 0.0
        %441 = vmatpush2.msra.mxu0 0.0
        %442 = vmatprep.subr.mxu0 0.0
        %443 = vmatpush2.msra.mxu0 0.0
        %444 = vmatprep.mubr.f32.mxu0 0.0
        %445 = vmatmul.mubr.f32.gmra.mxu0 %v378
        %v446 = vpop.f32.mrf.mxu0
        %v447 = vadd.f32 0.0, %v446
        %v448 = vpop.f32.mrf.mxu0
        %449 = vdwg.mxu0
        %450 = vset.pattern.permute.xlu0 1
        %451 = vperm.xlu0 %450, %v367
        %v452 = vpop.permute.xlu0 %451
        %vm453 = vcmp.eq.s32.totalorder %v452, %v369
        %v454 = vsel %vm453, 1, 0
        %v455 = vcvt.s32.f32 %v454
        %v457 = vsel %vm376, %v455, 0
        %459 = vmatprep.subr.mxu0 0.0
        %460 = vmatpush1.msra.mxu0 0.0
        %461 = vmatprep.subr.mxu0 0.0
        %462 = vmatpush1.msra.mxu0 0.0
        %463 = vmatprep.subr.mxu0 0.0
        %464 = vmatpush1.msra.mxu0 0.0
        %465 = vmatprep.subr.mxu0 0.0
        %466 = vmatpush1.msra.mxu0 0.0
        %467 = vmatprep.subr.mxu0 0.0
        %468 = vmatpush1.msra.mxu0 0.0
        %469 = vmatprep.subr.mxu0 0.0
        %470 = vmatpush1.msra.mxu0 0.0
        %471 = vmatprep.subr.mxu0 0.0
        %472 = vmatpush1.msra.mxu0 0.0
        %473 = vmatprep.subr.mxu0 0.0
        %474 = vmatpush1.msra.mxu0 0.0
        %475 = vmatprep.subr.mxu0 0.0
        %476 = vmatpush1.msra.mxu0 0.0
        %477 = vmatprep.subr.mxu0 0.0
        %478 = vmatpush1.msra.mxu0 0.0
        %479 = vmatprep.subr.mxu0 0.0
        %480 = vmatpush1.msra.mxu0 0.0
        %481 = vmatprep.subr.mxu0 0.0
        %482 = vmatpush1.msra.mxu0 0.0
        %483 = vmatprep.subr.mxu0 0.0
        %484 = vmatpush1.msra.mxu0 0.0
        %485 = vmatprep.subr.mxu0 0.0
        %486 = vmatpush1.msra.mxu0 0.0
        %487 = vmatprep.subr.mxu0 0.0
        %488 = vmatpush1.msra.mxu0 %v366
        %489 = vmatprep.subr.mxu0 0.0
        %490 = vmatpush1.msra.mxu0 %v365
        %491 = vmatprep.subr.mxu0 0.0
        %492 = vmatpush2.msra.mxu0 0.0
        %493 = vmatprep.subr.mxu0 0.0
        %494 = vmatpush2.msra.mxu0 0.0
        %495 = vmatprep.subr.mxu0 0.0
        %496 = vmatpush2.msra.mxu0 0.0
        %497 = vmatprep.subr.mxu0 0.0
        %498 = vmatpush2.msra.mxu0 0.0
        %499 = vmatprep.subr.mxu0 0.0
        %500 = vmatpush2.msra.mxu0 0.0
        %501 = vmatprep.subr.mxu0 0.0
        %502 = vmatpush2.msra.mxu0 0.0
        %503 = vmatprep.subr.mxu0 0.0
        %504 = vmatpush2.msra.mxu0 0.0
        %505 = vmatprep.subr.mxu0 0.0
        %506 = vmatpush2.msra.mxu0 0.0
        %507 = vmatprep.subr.mxu0 0.0
        %508 = vmatpush2.msra.mxu0 0.0
        %509 = vmatprep.subr.mxu0 0.0
        %510 = vmatpush2.msra.mxu0 0.0
        %511 = vmatprep.subr.mxu0 0.0
        %512 = vmatpush2.msra.mxu0 0.0
        %513 = vmatprep.subr.mxu0 0.0
        %514 = vmatpush2.msra.mxu0 0.0
        %515 = vmatprep.subr.mxu0 0.0
        %516 = vmatpush2.msra.mxu0 0.0
        %517 = vmatprep.subr.mxu0 0.0
        %518 = vmatpush2.msra.mxu0 0.0
        %519 = vmatprep.subr.mxu0 0.0
        %520 = vmatpush2.msra.mxu0 0.0
        %521 = vmatprep.subr.mxu0 0.0
        %522 = vmatpush2.msra.mxu0 0.0
        %523 = vmatprep.mubr.f32.mxu0 0.0
        %524 = vmatmul.mubr.f32.gmra.mxu0 %v457
        %v525 = vpop.f32.mrf.mxu0
        %v526 = vadd.f32 0.0, %v525
        %v527 = vpop.f32.mrf.mxu0
        %528 = vdwg.mxu0
        %v529 = vmax.f32 %v447, %v526
        %530 = vset.pattern.permute.xlu0 2
        %531 = vperm.xlu0 %530, %v367
        %v532 = vpop.permute.xlu0 %531
        %vm533 = vcmp.eq.s32.totalorder %v532, %v369
        %v534 = vsel %vm533, 1, 0
        %v535 = vcvt.s32.f32 %v534
        %v537 = vsel %vm376, %v535, 0
        %539 = vmatprep.subr.mxu0 0.0
        %540 = vmatpush1.msra.mxu0 0.0
        %541 = vmatprep.subr.mxu0 0.0
        %542 = vmatpush1.msra.mxu0 0.0
        %543 = vmatprep.subr.mxu0 0.0
        %544 = vmatpush1.msra.mxu0 0.0
        %545 = vmatprep.subr.mxu0 0.0
        %546 = vmatpush1.msra.mxu0 0.0
        %547 = vmatprep.subr.mxu0 0.0
        %548 = vmatpush1.msra.mxu0 0.0
        %549 = vmatprep.subr.mxu0 0.0
        %550 = vmatpush1.msra.mxu0 0.0
        %551 = vmatprep.subr.mxu0 0.0
        %552 = vmatpush1.msra.mxu0 0.0
        %553 = vmatprep.subr.mxu0 0.0
        %554 = vmatpush1.msra.mxu0 0.0
        %555 = vmatprep.subr.mxu0 0.0
        %556 = vmatpush1.msra.mxu0 0.0
        %557 = vmatprep.subr.mxu0 0.0
        %558 = vmatpush1.msra.mxu0 0.0
        %559 = vmatprep.subr.mxu0 0.0
        %560 = vmatpush1.msra.mxu0 0.0
        %561 = vmatprep.subr.mxu0 0.0
        %562 = vmatpush1.msra.mxu0 0.0
        %563 = vmatprep.subr.mxu0 0.0
        %564 = vmatpush1.msra.mxu0 0.0
        %565 = vmatprep.subr.mxu0 0.0
        %566 = vmatpush1.msra.mxu0 0.0
        %567 = vmatprep.subr.mxu0 0.0
        %568 = vmatpush1.msra.mxu0 %v366
        %569 = vmatprep.subr.mxu0 0.0
        %570 = vmatpush1.msra.mxu0 %v365
        %571 = vmatprep.subr.mxu0 0.0
        %572 = vmatpush2.msra.mxu0 0.0
        %573 = vmatprep.subr.mxu0 0.0
        %574 = vmatpush2.msra.mxu0 0.0
        %575 = vmatprep.subr.mxu0 0.0
        %576 = vmatpush2.msra.mxu0 0.0
        %577 = vmatprep.subr.mxu0 0.0
        %578 = vmatpush2.msra.mxu0 0.0
        %579 = vmatprep.subr.mxu0 0.0
        %580 = vmatpush2.msra.mxu0 0.0
        %581 = vmatprep.subr.mxu0 0.0
        %582 = vmatpush2.msra.mxu0 0.0
        %583 = vmatprep.subr.mxu0 0.0
        %584 = vmatpush2.msra.mxu0 0.0
        %585 = vmatprep.subr.mxu0 0.0
        %586 = vmatpush2.msra.mxu0 0.0
        %587 = vmatprep.subr.mxu0 0.0
        %588 = vmatpush2.msra.mxu0 0.0
        %589 = vmatprep.subr.mxu0 0.0
        %590 = vmatpush2.msra.mxu0 0.0
        %591 = vmatprep.subr.mxu0 0.0
        %592 = vmatpush2.msra.mxu0 0.0
        %593 = vmatprep.subr.mxu0 0.0
        %594 = vmatpush2.msra.mxu0 0.0
        %595 = vmatprep.subr.mxu0 0.0
        %596 = vmatpush2.msra.mxu0 0.0
        %597 = vmatprep.subr.mxu0 0.0
        %598 = vmatpush2.msra.mxu0 0.0
        %599 = vmatprep.subr.mxu0 0.0
        %600 = vmatpush2.msra.mxu0 0.0
        %601 = vmatprep.subr.mxu0 0.0
        %602 = vmatpush2.msra.mxu0 0.0
        %603 = vmatprep.mubr.f32.mxu0 0.0
        %604 = vmatmul.mubr.f32.gmra.mxu0 %v537
        %v605 = vpop.f32.mrf.mxu0
        %v606 = vadd.f32 0.0, %v605
        %v607 = vpop.f32.mrf.mxu0
        %608 = vdwg.mxu0
        %v609 = vmax.f32 %v529, %v606
        %610 = vset.pattern.permute.xlu0 3
        %611 = vperm.xlu0 %610, %v367
        %v612 = vpop.permute.xlu0 %611
        %vm613 = vcmp.eq.s32.totalorder %v612, %v369
        %v614 = vsel %vm613, 1, 0
        %v615 = vcvt.s32.f32 %v614
        %v617 = vsel %vm376, %v615, 0
        %619 = vmatprep.subr.mxu0 0.0
        %620 = vmatpush1.msra.mxu0 0.0
        %621 = vmatprep.subr.mxu0 0.0
        %622 = vmatpush1.msra.mxu0 0.0
        %623 = vmatprep.subr.mxu0 0.0
        %624 = vmatpush1.msra.mxu0 0.0
        %625 = vmatprep.subr.mxu0 0.0
        %626 = vmatpush1.msra.mxu0 0.0
        %627 = vmatprep.subr.mxu0 0.0
        %628 = vmatpush1.msra.mxu0 0.0
        %629 = vmatprep.subr.mxu0 0.0
        %630 = vmatpush1.msra.mxu0 0.0
        %631 = vmatprep.subr.mxu0 0.0
        %632 = vmatpush1.msra.mxu0 0.0
        %633 = vmatprep.subr.mxu0 0.0
        %634 = vmatpush1.msra.mxu0 0.0
        %635 = vmatprep.subr.mxu0 0.0
        %636 = vmatpush1.msra.mxu0 0.0
        %637 = vmatprep.subr.mxu0 0.0
        %638 = vmatpush1.msra.mxu0 0.0
        %639 = vmatprep.subr.mxu0 0.0
        %640 = vmatpush1.msra.mxu0 0.0
        %641 = vmatprep.subr.mxu0 0.0
        %642 = vmatpush1.msra.mxu0 0.0
        %643 = vmatprep.subr.mxu0 0.0
        %644 = vmatpush1.msra.mxu0 0.0
        %645 = vmatprep.subr.mxu0 0.0
        %646 = vmatpush1.msra.mxu0 0.0
        %647 = vmatprep.subr.mxu0 0.0
        %648 = vmatpush1.msra.mxu0 %v366
        %649 = vmatprep.subr.mxu0 0.0
        %650 = vmatpush1.msra.mxu0 %v365
        %651 = vmatprep.subr.mxu0 0.0
        %652 = vmatpush2.msra.mxu0 0.0
        %653 = vmatprep.subr.mxu0 0.0
        %654 = vmatpush2.msra.mxu0 0.0
        %655 = vmatprep.subr.mxu0 0.0
        %656 = vmatpush2.msra.mxu0 0.0
        %657 = vmatprep.subr.mxu0 0.0
        %658 = vmatpush2.msra.mxu0 0.0
        %659 = vmatprep.subr.mxu0 0.0
        %660 = vmatpush2.msra.mxu0 0.0
        %661 = vmatprep.subr.mxu0 0.0
        %662 = vmatpush2.msra.mxu0 0.0
        %663 = vmatprep.subr.mxu0 0.0
        %664 = vmatpush2.msra.mxu0 0.0
        %665 = vmatprep.subr.mxu0 0.0
        %666 = vmatpush2.msra.mxu0 0.0
        %667 = vmatprep.subr.mxu0 0.0
        %668 = vmatpush2.msra.mxu0 0.0
        %669 = vmatprep.subr.mxu0 0.0
        %670 = vmatpush2.msra.mxu0 0.0
        %671 = vmatprep.subr.mxu0 0.0
        %672 = vmatpush2.msra.mxu0 0.0
        %673 = vmatprep.subr.mxu0 0.0
        %674 = vmatpush2.msra.mxu0 0.0
        %675 = vmatprep.subr.mxu0 0.0
        %676 = vmatpush2.msra.mxu0 0.0
        %677 = vmatprep.subr.mxu0 0.0
        %678 = vmatpush2.msra.mxu0 0.0
        %679 = vmatprep.subr.mxu0 0.0
        %680 = vmatpush2.msra.mxu0 0.0
        %681 = vmatprep.subr.mxu0 0.0
        %682 = vmatpush2.msra.mxu0 0.0
        %683 = vmatprep.mubr.f32.mxu0 0.0
        %684 = vmatmul.mubr.f32.gmra.mxu0 %v617
        %v685 = vpop.f32.mrf.mxu0
        %v686 = vadd.f32 0.0, %v685
        %v687 = vpop.f32.mrf.mxu0
        %688 = vdwg.mxu0
        %v689 = vmax.f32 %v609, %v686
        %690 = vset.pattern.permute.xlu0 4
        %691 = vperm.xlu0 %690, %v367
        %v692 = vpop.permute.xlu0 %691
        %vm693 = vcmp.eq.s32.totalorder %v692, %v369
        %v694 = vsel %vm693, 1, 0
        %v695 = vcvt.s32.f32 %v694
        %v697 = vsel %vm376, %v695, 0
        %699 = vmatprep.subr.mxu0 0.0
        %700 = vmatpush1.msra.mxu0 0.0
        %701 = vmatprep.subr.mxu0 0.0
        %702 = vmatpush1.msra.mxu0 0.0
        %703 = vmatprep.subr.mxu0 0.0
        %704 = vmatpush1.msra.mxu0 0.0
        %705 = vmatprep.subr.mxu0 0.0
        %706 = vmatpush1.msra.mxu0 0.0
        %707 = vmatprep.subr.mxu0 0.0
        %708 = vmatpush1.msra.mxu0 0.0
        %709 = vmatprep.subr.mxu0 0.0
        %710 = vmatpush1.msra.mxu0 0.0
        %711 = vmatprep.subr.mxu0 0.0
        %712 = vmatpush1.msra.mxu0 0.0
        %713 = vmatprep.subr.mxu0 0.0
        %714 = vmatpush1.msra.mxu0 0.0
        %715 = vmatprep.subr.mxu0 0.0
        %716 = vmatpush1.msra.mxu0 0.0
        %717 = vmatprep.subr.mxu0 0.0
        %718 = vmatpush1.msra.mxu0 0.0
        %719 = vmatprep.subr.mxu0 0.0
        %720 = vmatpush1.msra.mxu0 0.0
        %721 = vmatprep.subr.mxu0 0.0
        %722 = vmatpush1.msra.mxu0 0.0
        %723 = vmatprep.subr.mxu0 0.0
        %724 = vmatpush1.msra.mxu0 0.0
        %725 = vmatprep.subr.mxu0 0.0
        %726 = vmatpush1.msra.mxu0 0.0
        %727 = vmatprep.subr.mxu0 0.0
        %728 = vmatpush1.msra.mxu0 %v366
        %729 = vmatprep.subr.mxu0 0.0
        %730 = vmatpush1.msra.mxu0 %v365
        %731 = vmatprep.subr.mxu0 0.0
        %732 = vmatpush2.msra.mxu0 0.0
        %733 = vmatprep.subr.mxu0 0.0
        %734 = vmatpush2.msra.mxu0 0.0
        %735 = vmatprep.subr.mxu0 0.0
        %736 = vmatpush2.msra.mxu0 0.0
        %737 = vmatprep.subr.mxu0 0.0
        %738 = vmatpush2.msra.mxu0 0.0
        %739 = vmatprep.subr.mxu0 0.0
        %740 = vmatpush2.msra.mxu0 0.0
        %741 = vmatprep.subr.mxu0 0.0
        %742 = vmatpush2.msra.mxu0 0.0
        %743 = vmatprep.subr.mxu0 0.0
        %744 = vmatpush2.msra.mxu0 0.0
        %745 = vmatprep.subr.mxu0 0.0
        %746 = vmatpush2.msra.mxu0 0.0
        %747 = vmatprep.subr.mxu0 0.0
        %748 = vmatpush2.msra.mxu0 0.0
        %749 = vmatprep.subr.mxu0 0.0
        %750 = vmatpush2.msra.mxu0 0.0
        %751 = vmatprep.subr.mxu0 0.0
        %752 = vmatpush2.msra.mxu0 0.0
        %753 = vmatprep.subr.mxu0 0.0
        %754 = vmatpush2.msra.mxu0 0.0
        %755 = vmatprep.subr.mxu0 0.0
        %756 = vmatpush2.msra.mxu0 0.0
        %757 = vmatprep.subr.mxu0 0.0
        %758 = vmatpush2.msra.mxu0 0.0
        %759 = vmatprep.subr.mxu0 0.0
        %760 = vmatpush2.msra.mxu0 0.0
        %761 = vmatprep.subr.mxu0 0.0
        %762 = vmatpush2.msra.mxu0 0.0
        %763 = vmatprep.mubr.f32.mxu0 0.0
        %764 = vmatmul.mubr.f32.gmra.mxu0 %v697
        %v765 = vpop.f32.mrf.mxu0
        %v766 = vadd.f32 0.0, %v765
        %v767 = vpop.f32.mrf.mxu0
        %768 = vdwg.mxu0
        %v769 = vmax.f32 %v689, %v766
        %770 = vset.pattern.permute.xlu0 5
        %771 = vperm.xlu0 %770, %v367
        %v772 = vpop.permute.xlu0 %771
        %vm773 = vcmp.eq.s32.totalorder %v772, %v369
        %v774 = vsel %vm773, 1, 0
        %v775 = vcvt.s32.f32 %v774
        %v777 = vsel %vm376, %v775, 0
        %779 = vmatprep.subr.mxu0 0.0
        %780 = vmatpush1.msra.mxu0 0.0
        %781 = vmatprep.subr.mxu0 0.0
        %782 = vmatpush1.msra.mxu0 0.0
        %783 = vmatprep.subr.mxu0 0.0
        %784 = vmatpush1.msra.mxu0 0.0
        %785 = vmatprep.subr.mxu0 0.0
        %786 = vmatpush1.msra.mxu0 0.0
        %787 = vmatprep.subr.mxu0 0.0
        %788 = vmatpush1.msra.mxu0 0.0
        %789 = vmatprep.subr.mxu0 0.0
        %790 = vmatpush1.msra.mxu0 0.0
        %791 = vmatprep.subr.mxu0 0.0
        %792 = vmatpush1.msra.mxu0 0.0
        %793 = vmatprep.subr.mxu0 0.0
        %794 = vmatpush1.msra.mxu0 0.0
        %795 = vmatprep.subr.mxu0 0.0
        %796 = vmatpush1.msra.mxu0 0.0
        %797 = vmatprep.subr.mxu0 0.0
        %798 = vmatpush1.msra.mxu0 0.0
        %799 = vmatprep.subr.mxu0 0.0
        %800 = vmatpush1.msra.mxu0 0.0
        %801 = vmatprep.subr.mxu0 0.0
        %802 = vmatpush1.msra.mxu0 0.0
        %803 = vmatprep.subr.mxu0 0.0
        %804 = vmatpush1.msra.mxu0 0.0
        %805 = vmatprep.subr.mxu0 0.0
        %806 = vmatpush1.msra.mxu0 0.0
        %807 = vmatprep.subr.mxu0 0.0
        %808 = vmatpush1.msra.mxu0 %v366
        %809 = vmatprep.subr.mxu0 0.0
        %810 = vmatpush1.msra.mxu0 %v365
        %811 = vmatprep.subr.mxu0 0.0
        %812 = vmatpush2.msra.mxu0 0.0
        %813 = vmatprep.subr.mxu0 0.0
        %814 = vmatpush2.msra.mxu0 0.0
        %815 = vmatprep.subr.mxu0 0.0
        %816 = vmatpush2.msra.mxu0 0.0
        %817 = vmatprep.subr.mxu0 0.0
        %818 = vmatpush2.msra.mxu0 0.0
        %819 = vmatprep.subr.mxu0 0.0
        %820 = vmatpush2.msra.mxu0 0.0
        %821 = vmatprep.subr.mxu0 0.0
        %822 = vmatpush2.msra.mxu0 0.0
        %823 = vmatprep.subr.mxu0 0.0
        %824 = vmatpush2.msra.mxu0 0.0
        %825 = vmatprep.subr.mxu0 0.0
        %826 = vmatpush2.msra.mxu0 0.0
        %827 = vmatprep.subr.mxu0 0.0
        %828 = vmatpush2.msra.mxu0 0.0
        %829 = vmatprep.subr.mxu0 0.0
        %830 = vmatpush2.msra.mxu0 0.0
        %831 = vmatprep.subr.mxu0 0.0
        %832 = vmatpush2.msra.mxu0 0.0
        %833 = vmatprep.subr.mxu0 0.0
        %834 = vmatpush2.msra.mxu0 0.0
        %835 = vmatprep.subr.mxu0 0.0
        %836 = vmatpush2.msra.mxu0 0.0
        %837 = vmatprep.subr.mxu0 0.0
        %838 = vmatpush2.msra.mxu0 0.0
        %839 = vmatprep.subr.mxu0 0.0
        %840 = vmatpush2.msra.mxu0 0.0
        %841 = vmatprep.subr.mxu0 0.0
        %842 = vmatpush2.msra.mxu0 0.0
        %843 = vmatprep.mubr.f32.mxu0 0.0
        %844 = vmatmul.mubr.f32.gmra.mxu0 %v777
        %v845 = vpop.f32.mrf.mxu0
        %v846 = vadd.f32 0.0, %v845
        %v847 = vpop.f32.mrf.mxu0
        %848 = vdwg.mxu0
        %v849 = vmax.f32 %v769, %v846
        %850 = vset.pattern.permute.xlu0 6
        %851 = vperm.xlu0 %850, %v367
        %v852 = vpop.permute.xlu0 %851
        %vm853 = vcmp.eq.s32.totalorder %v852, %v369
        %v854 = vsel %vm853, 1, 0
        %v855 = vcvt.s32.f32 %v854
        %v857 = vsel %vm376, %v855, 0
        %859 = vmatprep.subr.mxu0 0.0
        %860 = vmatpush1.msra.mxu0 0.0
        %861 = vmatprep.subr.mxu0 0.0
        %862 = vmatpush1.msra.mxu0 0.0
        %863 = vmatprep.subr.mxu0 0.0
        %864 = vmatpush1.msra.mxu0 0.0
        %865 = vmatprep.subr.mxu0 0.0
        %866 = vmatpush1.msra.mxu0 0.0
        %867 = vmatprep.subr.mxu0 0.0
        %868 = vmatpush1.msra.mxu0 0.0
        %869 = vmatprep.subr.mxu0 0.0
        %870 = vmatpush1.msra.mxu0 0.0
        %871 = vmatprep.subr.mxu0 0.0
        %872 = vmatpush1.msra.mxu0 0.0
        %873 = vmatprep.subr.mxu0 0.0
        %874 = vmatpush1.msra.mxu0 0.0
        %875 = vmatprep.subr.mxu0 0.0
        %876 = vmatpush1.msra.mxu0 0.0
        %877 = vmatprep.subr.mxu0 0.0
        %878 = vmatpush1.msra.mxu0 0.0
        %879 = vmatprep.subr.mxu0 0.0
        %880 = vmatpush1.msra.mxu0 0.0
        %881 = vmatprep.subr.mxu0 0.0
        %882 = vmatpush1.msra.mxu0 0.0
        %883 = vmatprep.subr.mxu0 0.0
        %884 = vmatpush1.msra.mxu0 0.0
        %885 = vmatprep.subr.mxu0 0.0
        %886 = vmatpush1.msra.mxu0 0.0
        %887 = vmatprep.subr.mxu0 0.0
        %888 = vmatpush1.msra.mxu0 %v366
        %889 = vmatprep.subr.mxu0 0.0
        %890 = vmatpush1.msra.mxu0 %v365
        %891 = vmatprep.subr.mxu0 0.0
        %892 = vmatpush2.msra.mxu0 0.0
        %893 = vmatprep.subr.mxu0 0.0
        %894 = vmatpush2.msra.mxu0 0.0
        %895 = vmatprep.subr.mxu0 0.0
        %896 = vmatpush2.msra.mxu0 0.0
        %897 = vmatprep.subr.mxu0 0.0
        %898 = vmatpush2.msra.mxu0 0.0
        %899 = vmatprep.subr.mxu0 0.0
        %900 = vmatpush2.msra.mxu0 0.0
        %901 = vmatprep.subr.mxu0 0.0
        %902 = vmatpush2.msra.mxu0 0.0
        %903 = vmatprep.subr.mxu0 0.0
        %904 = vmatpush2.msra.mxu0 0.0
        %905 = vmatprep.subr.mxu0 0.0
        %906 = vmatpush2.msra.mxu0 0.0
        %907 = vmatprep.subr.mxu0 0.0
        %908 = vmatpush2.msra.mxu0 0.0
        %909 = vmatprep.subr.mxu0 0.0
        %910 = vmatpush2.msra.mxu0 0.0
        %911 = vmatprep.subr.mxu0 0.0
        %912 = vmatpush2.msra.mxu0 0.0
        %913 = vmatprep.subr.mxu0 0.0
        %914 = vmatpush2.msra.mxu0 0.0
        %915 = vmatprep.subr.mxu0 0.0
        %916 = vmatpush2.msra.mxu0 0.0
        %917 = vmatprep.subr.mxu0 0.0
        %918 = vmatpush2.msra.mxu0 0.0
        %919 = vmatprep.subr.mxu0 0.0
        %920 = vmatpush2.msra.mxu0 0.0
        %921 = vmatprep.subr.mxu0 0.0
        %922 = vmatpush2.msra.mxu0 0.0
        %923 = vmatprep.mubr.f32.mxu0 0.0
        %924 = vmatmul.mubr.f32.gmra.mxu0 %v857
        %v925 = vpop.f32.mrf.mxu0
        %v926 = vadd.f32 0.0, %v925
        %v927 = vpop.f32.mrf.mxu0
        %928 = vdwg.mxu0
        %v929 = vmax.f32 %v849, %v926
        %930 = vset.pattern.permute.xlu0 7
        %931 = vperm.xlu0 %930, %v367
        %v932 = vpop.permute.xlu0 %931
        %vm933 = vcmp.eq.s32.totalorder %v932, %v369
        %v934 = vsel %vm933, 1, 0
        %v935 = vcvt.s32.f32 %v934
        %v937 = vsel %vm376, %v935, 0
        %939 = vmatprep.subr.mxu0 0.0
        %940 = vmatpush1.msra.mxu0 0.0
        %941 = vmatprep.subr.mxu0 0.0
        %942 = vmatpush1.msra.mxu0 0.0
        %943 = vmatprep.subr.mxu0 0.0
        %944 = vmatpush1.msra.mxu0 0.0
        %945 = vmatprep.subr.mxu0 0.0
        %946 = vmatpush1.msra.mxu0 0.0
        %947 = vmatprep.subr.mxu0 0.0
        %948 = vmatpush1.msra.mxu0 0.0
        %949 = vmatprep.subr.mxu0 0.0
        %950 = vmatpush1.msra.mxu0 0.0
        %951 = vmatprep.subr.mxu0 0.0
        %952 = vmatpush1.msra.mxu0 0.0
        %953 = vmatprep.subr.mxu0 0.0
        %954 = vmatpush1.msra.mxu0 0.0
        %955 = vmatprep.subr.mxu0 0.0
        %956 = vmatpush1.msra.mxu0 0.0
        %957 = vmatprep.subr.mxu0 0.0
        %958 = vmatpush1.msra.mxu0 0.0
        %959 = vmatprep.subr.mxu0 0.0
        %960 = vmatpush1.msra.mxu0 0.0
        %961 = vmatprep.subr.mxu0 0.0
        %962 = vmatpush1.msra.mxu0 0.0
        %963 = vmatprep.subr.mxu0 0.0
        %964 = vmatpush1.msra.mxu0 0.0
        %965 = vmatprep.subr.mxu0 0.0
        %966 = vmatpush1.msra.mxu0 0.0
        %967 = vmatprep.subr.mxu0 0.0
        %968 = vmatpush1.msra.mxu0 %v366
        %969 = vmatprep.subr.mxu0 0.0
        %970 = vmatpush1.msra.mxu0 %v365
        %971 = vmatprep.subr.mxu0 0.0
        %972 = vmatpush2.msra.mxu0 0.0
        %973 = vmatprep.subr.mxu0 0.0
        %974 = vmatpush2.msra.mxu0 0.0
        %975 = vmatprep.subr.mxu0 0.0
        %976 = vmatpush2.msra.mxu0 0.0
        %977 = vmatprep.subr.mxu0 0.0
        %978 = vmatpush2.msra.mxu0 0.0
        %979 = vmatprep.subr.mxu0 0.0
        %980 = vmatpush2.msra.mxu0 0.0
        %981 = vmatprep.subr.mxu0 0.0
        %982 = vmatpush2.msra.mxu0 0.0
        %983 = vmatprep.subr.mxu0 0.0
        %984 = vmatpush2.msra.mxu0 0.0
        %985 = vmatprep.subr.mxu0 0.0
        %986 = vmatpush2.msra.mxu0 0.0
        %987 = vmatprep.subr.mxu0 0.0
        %988 = vmatpush2.msra.mxu0 0.0
        %989 = vmatprep.subr.mxu0 0.0
        %990 = vmatpush2.msra.mxu0 0.0
        %991 = vmatprep.subr.mxu0 0.0
        %992 = vmatpush2.msra.mxu0 0.0
        %993 = vmatprep.subr.mxu0 0.0
        %994 = vmatpush2.msra.mxu0 0.0
        %995 = vmatprep.subr.mxu0 0.0
        %996 = vmatpush2.msra.mxu0 0.0
        %997 = vmatprep.subr.mxu0 0.0
        %998 = vmatpush2.msra.mxu0 0.0
        %999 = vmatprep.subr.mxu0 0.0
        %1000 = vmatpush2.msra.mxu0 0.0
        %1001 = vmatprep.subr.mxu0 0.0
        %1002 = vmatpush2.msra.mxu0 0.0
        %1003 = vmatprep.mubr.f32.mxu0 0.0
        %1004 = vmatmul.mubr.f32.gmra.mxu0 %v937
        %v1005 = vpop.f32.mrf.mxu0
        %v1006 = vadd.f32 0.0, %v1005
        %v1007 = vpop.f32.mrf.mxu0
        %1008 = vdwg.mxu0
        %v1009 = vmax.f32 %v929, %v1006
        %v1010 = vld [vmem:[%s302] sm:$0xff]
        %v1011 = vld [vmem:[#allocation5] sm:$0xff]
        %v1012 = vld [vmem:[#allocation5 + $0x8] sm:$0xff]
        %v1013 = vld [vmem:[#allocation5 + $0x10] sm:$0xff]
        %v1014 = vld [vmem:[#allocation5 + $0x18] sm:$0xff]
        %v1015 = vld [vmem:[#allocation5 + $0x20] sm:$0xff]
        %v1016 = vld [vmem:[#allocation5 + $0x28] sm:$0xff]
        %v1017 = vld [vmem:[#allocation5 + $0x30] sm:$0xff]
        %v1018 = vld [vmem:[#allocation5 + $0x38] sm:$0xff]
        %v1019 = vld [vmem:[#allocation5 + $0x40] sm:$0xff]
        %v1020 = vld [vmem:[#allocation5 + $0x48] sm:$0xff]
        %v1021 = vld [vmem:[#allocation5 + $0x50] sm:$0xff]
        %v1022 = vld [vmem:[#allocation5 + $0x58] sm:$0xff]
        %v1023 = vld [vmem:[#allocation5 + $0x60] sm:$0xff]
        %v1024 = vld [vmem:[#allocation5 + $0x68] sm:$0xff]
        %v1025 = vld [vmem:[#allocation5 + $0x70] sm:$0xff]
        %v1026 = vld [vmem:[#allocation5 + $0x78] sm:$0xff]
        %v1027 = vld [vmem:[#allocation7] sm:$0xff]
        %v1028 = vld [vmem:[#allocation7 + $0x8] sm:$0xff]
        %v1029 = vld [vmem:[#allocation7 + $0x10] sm:$0xff]
        %v1030 = vld [vmem:[#allocation7 + $0x18] sm:$0xff]
        %v1031 = vld [vmem:[#allocation7 + $0x20] sm:$0xff]
        %v1032 = vld [vmem:[#allocation7 + $0x28] sm:$0xff]
        %v1033 = vld [vmem:[#allocation7 + $0x30] sm:$0xff]
        %v1034 = vld [vmem:[#allocation7 + $0x38] sm:$0xff]
        %v1035 = vld [vmem:[#allocation7 + $0x40] sm:$0xff]
        %v1036 = vld [vmem:[#allocation7 + $0x48] sm:$0xff]
        %v1037 = vld [vmem:[#allocation7 + $0x50] sm:$0xff]
        %v1038 = vld [vmem:[#allocation7 + $0x58] sm:$0xff]
        %v1039 = vld [vmem:[#allocation7 + $0x60] sm:$0xff]
        %v1040 = vld [vmem:[#allocation7 + $0x68] sm:$0xff]
        %v1041 = vld [vmem:[#allocation7 + $0x70] sm:$0xff]
        %v1042 = vld [vmem:[#allocation7 + $0x78] sm:$0xff]
        %1043 = vmatprep.subr.mxu0 0.0
        %1044 = vmatpush1.msra.mxu0 %v1042
        %1045 = vmatprep.subr.mxu0 0.0
        %1046 = vmatpush1.msra.mxu0 %v1041
        %1047 = vmatprep.subr.mxu0 0.0
        %1048 = vmatpush1.msra.mxu0 %v1040
        %1049 = vmatprep.subr.mxu0 0.0
        %1050 = vmatpush1.msra.mxu0 %v1039
        %1051 = vmatprep.subr.mxu0 0.0
        %1052 = vmatpush1.msra.mxu0 %v1038
        %1053 = vmatprep.subr.mxu0 0.0
        %1054 = vmatpush1.msra.mxu0 %v1037
        %1055 = vmatprep.subr.mxu0 0.0
        %1056 = vmatpush1.msra.mxu0 %v1036
        %1057 = vmatprep.subr.mxu0 0.0
        %1058 = vmatpush1.msra.mxu0 %v1035
        %1059 = vmatprep.subr.mxu0 0.0
        %1060 = vmatpush1.msra.mxu0 %v1034
        %1061 = vmatprep.subr.mxu0 0.0
        %1062 = vmatpush1.msra.mxu0 %v1033
        %1063 = vmatprep.subr.mxu0 0.0
        %1064 = vmatpush1.msra.mxu0 %v1032
        %1065 = vmatprep.subr.mxu0 0.0
        %1066 = vmatpush1.msra.mxu0 %v1031
        %1067 = vmatprep.subr.mxu0 0.0
        %1068 = vmatpush1.msra.mxu0 %v1030
        %1069 = vmatprep.subr.mxu0 0.0
        %1070 = vmatpush1.msra.mxu0 %v1029
        %1071 = vmatprep.subr.mxu0 0.0
        %1072 = vmatpush1.msra.mxu0 %v1028
        %1073 = vmatprep.subr.mxu0 0.0
        %1074 = vmatpush1.msra.mxu0 %v1027
        %1075 = vmatprep.subr.mxu0 0.0
        %1076 = vmatpush2.msra.mxu0 0.0
        %1077 = vmatprep.subr.mxu0 0.0
        %1078 = vmatpush2.msra.mxu0 0.0
        %1079 = vmatprep.subr.mxu0 0.0
        %1080 = vmatpush2.msra.mxu0 0.0
        %1081 = vmatprep.subr.mxu0 0.0
        %1082 = vmatpush2.msra.mxu0 0.0
        %1083 = vmatprep.subr.mxu0 0.0
        %1084 = vmatpush2.msra.mxu0 0.0
        %1085 = vmatprep.subr.mxu0 0.0
        %1086 = vmatpush2.msra.mxu0 0.0
        %1087 = vmatprep.subr.mxu0 0.0
        %1088 = vmatpush2.msra.mxu0 0.0
        %1089 = vmatprep.subr.mxu0 0.0
        %1090 = vmatpush2.msra.mxu0 0.0
        %1091 = vmatprep.subr.mxu0 0.0
        %1092 = vmatpush2.msra.mxu0 0.0
        %1093 = vmatprep.subr.mxu0 0.0
        %1094 = vmatpush2.msra.mxu0 0.0
        %1095 = vmatprep.subr.mxu0 0.0
        %1096 = vmatpush2.msra.mxu0 0.0
        %1097 = vmatprep.subr.mxu0 0.0
        %1098 = vmatpush2.msra.mxu0 0.0
        %1099 = vmatprep.subr.mxu0 0.0
        %1100 = vmatpush2.msra.mxu0 0.0
        %1101 = vmatprep.subr.mxu0 0.0
        %1102 = vmatpush2.msra.mxu0 0.0
        %1103 = vmatprep.subr.mxu0 0.0
        %1104 = vmatpush2.msra.mxu0 0.0
        %1105 = vmatprep.subr.mxu0 0.0
        %1106 = vmatpush2.msra.mxu0 0.0
        %1107 = vmatprep.mubr.f32.mxu0 0.0
        %1108 = vmatmul.mubr.f32.gmra.mxu0 %v1009
        %v1109 = vpop.f32.mrf.mxu0
        %v1110 = vadd.f32 0.0, %v1109
        %v1111 = vpop.f32.mrf.mxu0
        %1112 = vdwg.mxu0
        %1113 = vmatprep.subr.mxu0 0.0
        %1114 = vmatpush1.msra.mxu0 %v1026
        %1115 = vmatprep.subr.mxu0 0.0
        %1116 = vmatpush1.msra.mxu0 %v1025
        %1117 = vmatprep.subr.mxu0 0.0
        %1118 = vmatpush1.msra.mxu0 %v1024
        %1119 = vmatprep.subr.mxu0 0.0
        %1120 = vmatpush1.msra.mxu0 %v1023
        %1121 = vmatprep.subr.mxu0 0.0
        %1122 = vmatpush1.msra.mxu0 %v1022
        %1123 = vmatprep.subr.mxu0 0.0
        %1124 = vmatpush1.msra.mxu0 %v1021
        %1125 = vmatprep.subr.mxu0 0.0
        %1126 = vmatpush1.msra.mxu0 %v1020
        %1127 = vmatprep.subr.mxu0 0.0
        %1128 = vmatpush1.msra.mxu0 %v1019
        %1129 = vmatprep.subr.mxu0 0.0
        %1130 = vmatpush1.msra.mxu0 %v1018
        %1131 = vmatprep.subr.mxu0 0.0
        %1132 = vmatpush1.msra.mxu0 %v1017
        %1133 = vmatprep.subr.mxu0 0.0
        %1134 = vmatpush1.msra.mxu0 %v1016
        %1135 = vmatprep.subr.mxu0 0.0
        %1136 = vmatpush1.msra.mxu0 %v1015
        %1137 = vmatprep.subr.mxu0 0.0
        %1138 = vmatpush1.msra.mxu0 %v1014
        %1139 = vmatprep.subr.mxu0 0.0
        %1140 = vmatpush1.msra.mxu0 %v1013
        %1141 = vmatprep.subr.mxu0 0.0
        %1142 = vmatpush1.msra.mxu0 %v1012
        %1143 = vmatprep.subr.mxu0 0.0
        %1144 = vmatpush1.msra.mxu0 %v1011
        %1145 = vmatprep.subr.mxu0 0.0
        %1146 = vmatpush2.msra.mxu0 0.0
        %1147 = vmatprep.subr.mxu0 0.0
        %1148 = vmatpush2.msra.mxu0 0.0
        %1149 = vmatprep.subr.mxu0 0.0
        %1150 = vmatpush2.msra.mxu0 0.0
        %1151 = vmatprep.subr.mxu0 0.0
        %1152 = vmatpush2.msra.mxu0 0.0
        %1153 = vmatprep.subr.mxu0 0.0
        %1154 = vmatpush2.msra.mxu0 0.0
        %1155 = vmatprep.subr.mxu0 0.0
        %1156 = vmatpush2.msra.mxu0 0.0
        %1157 = vmatprep.subr.mxu0 0.0
        %1158 = vmatpush2.msra.mxu0 0.0
        %1159 = vmatprep.subr.mxu0 0.0
        %1160 = vmatpush2.msra.mxu0 0.0
        %1161 = vmatprep.subr.mxu0 0.0
        %1162 = vmatpush2.msra.mxu0 0.0
        %1163 = vmatprep.subr.mxu0 0.0
        %1164 = vmatpush2.msra.mxu0 0.0
        %1165 = vmatprep.subr.mxu0 0.0
        %1166 = vmatpush2.msra.mxu0 0.0
        %1167 = vmatprep.subr.mxu0 0.0
        %1168 = vmatpush2.msra.mxu0 0.0
        %1169 = vmatprep.subr.mxu0 0.0
        %1170 = vmatpush2.msra.mxu0 0.0
        %1171 = vmatprep.subr.mxu0 0.0
        %1172 = vmatpush2.msra.mxu0 0.0
        %1173 = vmatprep.subr.mxu0 0.0
        %1174 = vmatpush2.msra.mxu0 0.0
        %1175 = vmatprep.subr.mxu0 0.0
        %1176 = vmatpush2.msra.mxu0 0.0
        %1177 = vmatprep.mubr.f32.mxu0 0.0
        %1178 = vmatmul.mubr.f32.gmra.mxu0 %v1010
        %v1179 = vpop.f32.mrf.mxu0
        %v1180 = vadd.f32 %v1110, %v1179
        %v1181 = vpop.f32.mrf.mxu0
        %1182 = vdwg.mxu0
        %v1183 = vld [vmem:[%s5] sm:$0x1]
        %v1185 = vlaneseq
        %v1186 = vshrl.u32 %v1185, 7
        %v1187 = vsub.s32 0, %v1186
        %v1188 = vrot.slane %v1183, %v1187
        %v1190 = vadd.f32 %v1180, %v1188
        %v1191 = vmax.f32 %v1190, 0.0
        %1192 = vst [vmem:[%s351] sm:$0xff] %v1191
        %s1193 = sand.u32 %s191, 1
        %s1194 = scalar_lea.sflag [#allocation4], %s1193
        %s1195 = sand.u32 %s191, 1
        %s1196 = smul.addr %s1195, 8
        %s1197 = scalar_lea.vmem [#allocation8], %s1196
        // Predicated region
        $region57: #{tpu_custom_call.1} parent=43 // pred_check
          %p1198 = pneg %p201
        $region58: #{tpu_custom_call.1} parent=43 // pred_check_branch
          %1200 = sbr.rel (%p1198) target = $region60
        $region59: #{tpu_custom_call.1} parent=43 // pred_region
          %s1202 = ssub.s32 128, 128
          %1203 = vsyncadd %s1194, %s1202
          %s1204 = smul.addr %s28, 2
          %s1205 = sadd.s32 %s29, %s1204
          %s1206 = smul.addr %s1205, 128
          %s1207 = scalar_lea.hbm %s6, %s1206
          %s1209 = sshll.u32 %s1197, 4
          %s1210 = int_to_ptr.vmem [resolvable:$true] %s1209
          %1212 = dma.vmem_to_hbm [thread:$0]  %s1210, 128, %s1207, %s1194
        $region60: #{tpu_custom_call.1} parent=43 // pred_fallthru
          _
      $region44: #{tpu_custom_call.1} parent=5 // pred_fallthru
        _
      %p1213 = scmp.le.s32.totalorder 2, %s19
      // Predicated region
      $region61: #{tpu_custom_call.1} parent=5 // pred_check
        %p1214 = pneg %p1213
      $region62: #{tpu_custom_call.1} parent=5 // pred_check_branch
        %1216 = sbr.rel (%p1214) target = $region64
      $region63: #{tpu_custom_call.1} parent=5 // pred_region
        %s1217 = ssub.s32 %s19, 2
        // Predicated region
        $region65: #{tpu_custom_call.1} parent=63 // pred_check
          %p1218 = pneg %p207
        $region66: #{tpu_custom_call.1} parent=63 // pred_check_branch
          %1220 = sbr.rel (%p1218) target = $region68
        $region67: #{tpu_custom_call.1} parent=63 // pred_region
          %s1221 = sand.u32 %s192, 1
          %s1222 = scalar_lea.sflag [#allocation4], %s1221
          %s1223 = sand.u32 %s192, 1
          %s1224 = smul.addr %s1223, 8
          %s1225 = scalar_lea.vmem [#allocation8], %s1224
          %1226 = dma.done %s1222, 128
        $region68: #{tpu_custom_call.1} parent=63 // pred_fallthru
          _
      $region64: #{tpu_custom_call.1} parent=5 // pred_fallthru
        _
    $region6: #{tpu_custom_call.1} parent=1 // loop_footer
      %s23 = sadd.s32 1, %s19
    $region7: #{tpu_custom_call.1} parent=1 // loop_footer_branch
      %18 = sbr.rel target = $region3
    $region8: #{tpu_custom_call.1} parent=1 // loop_exit
      _
    %1227 = vsyncpa [#allocation3], 1
    %s1228 = scalar_lea.sflag [#allocation3], 1
    %1229 = vsyncpa %s1228, 1
    %1230 = vsyncpa [#allocation6], 1
    %1231 = vsyncpa [#allocation4], 1
    %s1232 = scalar_lea.sflag [#allocation4], 1
    %1233 = vsyncpa %s1232, 1

</llo_original>
